<compile_context>
chip_gen: v7x
topology: tpu7x:2x2x1
jax: 0.10.0
libtpu: 0.0.40
codegen_flags: <defaults>
</compile_context>

<pallas_src>
import jax
import jax.numpy as jnp
from jax.experimental import pallas as pl
from jax.experimental.pallas import tpu as pltpu


def _attention0_kernel(wt_ref, q_ref, k_ref, out_ref, attn_ref):
    """One grid step processes a block of `batch_block` batch elements.

    wt_ref  : (Din, Dout)          pre-transposed attn weight (same block every step)
    q_ref   : (Bb, T, Din)  f32    encoder_output block (query)
    k_ref   : (Bb, S, Dout)        given_keyphrases block (key == value)
    out_ref : (Bb, T, Dout + Din)  fused concat([context, encoder_output], -1)
    attn_ref: (Bb, T, S)           softmax attention weights
    """
    q = q_ref[...]                       # (Bb, T, Din)  f32 (exact passthrough)
    wt = wt_ref[...]                     # (Din, Dout)
    k = k_ref[...]                       # (Bb, S, Dout)
    bb, t, din = q.shape
    dout = k.shape[-1]
    cdt = wt.dtype                       # matmul compute dtype (f32 or bf16)

    # mat1 = attn(query) = q @ W.T  (weight already transposed in the wrapper).
    if bb == 1 or t % 8 == 0:
        # Fold batch into M for one big-M MXU matmul; the reshapes are
        # sublane-tile aligned under this condition (no relayout).
        mat1 = jnp.dot(q.reshape(bb * t, din).astype(cdt), wt,
                       preferred_element_type=jnp.float32).reshape(bb, t, dout)
    else:
        # Arbitrary T: keep the matmul 3-D to avoid a relayout-inducing reshape.
        mat1 = jnp.einsum("btd,do->bto", q.astype(cdt), wt,
                          preferred_element_type=jnp.float32)

    # scores = bmm(mat1, key^T) without materializing key^T.
    scores = jnp.einsum("bto,bso->bts", mat1.astype(cdt), k,
                        preferred_element_type=jnp.float32)      # (Bb, T, S)

    # softmax over src_len (axis=-1), matching torch.softmax(..., 2)
    m = jnp.max(scores, axis=-1, keepdims=True)
    e = jnp.exp(scores - m)
    denom = jnp.sum(e, axis=-1, keepdims=True)                   # >= 1, no hazard
    inv = pl.reciprocal(denom, approx=True)      # EUP slot (otherwise idle)
    inv = inv * (2.0 - denom * inv)              # one Newton step -> ~exact f32
    attn = e * inv                                               # (Bb, T, S) f32

    # context = bmm(attn, key)
    ctx = jnp.einsum("bts,bso->bto", attn.astype(cdt), k,
                     preferred_element_type=jnp.float32)         # (Bb, T, Dout)

    # Fused concat: both halves are already resident in VMEM, so write them
    # straight into the output block (no wrapper-side concatenate, no second
    # HBM read of encoder_output, no HBM round trip of ctx).
    out_ref[:, :, :dout] = ctx.astype(out_ref.dtype)
    out_ref[:, :, dout:] = q.astype(out_ref.dtype)
    attn_ref[...] = attn.astype(attn_ref.dtype)


def _pick_batch_block(B, T, target_rows=512):
    """Default batch elements per grid step.

    Prefer >= 2 grid steps when B > 1 (dual-TC on v7x via the 'parallel' axis,
    and input/output pipelining everywhere), while sizing the matmul M
    dimension (batch_block * T) toward the MXU sweet spot when B is large.
    """
    divisors = [d for d in range(1, B + 1) if B % d == 0]
    cands = [d for d in divisors if d < B] or divisors      # >= 2 steps if possible
    big_enough = [d for d in cands if d * T >= target_rows]
    return min(big_enough) if big_enough else max(cands)


def attention0_forward(encoder_output, given_keyphrases, encoder_padding_mask,
                       attn_weight, *, batch_block=None, key_buffers=2,
                       use_bf16_matmul=False):
    """Pallas equivalent of Attention0.forward (mask ignored, as in the reference).

    batch_block     : batch elements per grid step (default: auto, >= 2 steps).
    key_buffers     : pipeline depth for the key DMA (set 3 if the per-step
                      4*Bb*S*Dout key copy becomes exposed at large shapes).
    use_bf16_matmul : cast W and K to bf16 for the MXU (2x DMA / ~3x MXU win on
                      v6e/v7x) — loosens parity to ~1e-3, so off by default.
    """
    del encoder_padding_mask  # unused in the reference forward pass

    B, T, Din = encoder_output.shape
    Bk, S, Dout = given_keyphrases.shape
    assert Bk == B
    assert attn_weight.shape == (Dout, Din)

    if batch_block is None:
        batch_block = _pick_batch_block(B, T)
    assert B % batch_block == 0, "batch_block must divide B"
    num_blocks = B // batch_block

    # One-time XLA-side transpose: kernel computes q @ Wt with no in-kernel w.T.
    wt = jnp.transpose(attn_weight)                  # (Din, Dout)
    keys = given_keyphrases
    if use_bf16_matmul:
        wt = wt.astype(jnp.bfloat16)
        keys = keys.astype(jnp.bfloat16)
    k_itemsize = 2 if use_bf16_matmul else 4

    # Advisory cost estimate for XLA scheduling around the custom call.
    flops = 2 * B * T * Dout * (Din + 2 * S)
    bytes_accessed = (4 * (B * T * Din + B * T * (Dout + Din) + B * T * S)
                      + k_itemsize * (B * S * Dout + Din * Dout))
    cost = pl.CostEstimate(flops=flops, transcendentals=B * T * S,
                           bytes_accessed=bytes_accessed)

    # Explicit per-step VMEM budget (double-buffered in/out blocks + weight),
    # clamped to v7x's 64 MiB physical VMEM; 2x headroom for compiler scratch.
    est = (k_itemsize * Din * Dout
           + 2 * 4 * batch_block * T * Din
           + key_buffers * k_itemsize * batch_block * S * Dout
           + 2 * 4 * batch_block * T * (Dout + Din)
           + 2 * 4 * batch_block * T * S)
    vmem_limit = int(min(64 * 2 ** 20, max(16 * 2 ** 20, 2 * est)))

    key_spec_kwargs = {}
    if key_buffers != 2:
        key_spec_kwargs["pipeline_mode"] = pl.Buffered(key_buffers)

    # All blocks keep their last two dims equal to the full array dims, so the
    # (8, 128) divisibility rule is satisfied for arbitrary T / S / Din / Dout.
    grid_spec = pltpu.PrefetchScalarGridSpec(
        num_scalar_prefetch=0,
        grid=(num_blocks,),
        in_specs=[
            pl.BlockSpec((Din, Dout), lambda b: (0, 0)),                 # weight
            pl.BlockSpec((batch_block, T, Din), lambda b: (b, 0, 0)),    # query
            pl.BlockSpec((batch_block, S, Dout), lambda b: (b, 0, 0),    # keys
                         **key_spec_kwargs),
        ],
        out_specs=[
            pl.BlockSpec((batch_block, T, Dout + Din), lambda b: (b, 0, 0)),
            pl.BlockSpec((batch_block, T, S), lambda b: (b, 0, 0)),
        ],
    )

    attn_outputs, attn_weights = pl.pallas_call(
        _attention0_kernel,
        out_shape=(
            jax.ShapeDtypeStruct((B, T, Dout + Din), jnp.float32),
            jax.ShapeDtypeStruct((B, T, S), jnp.float32),
        ),
        grid_spec=grid_spec,
        compiler_params=pltpu.CompilerParams(
            dimension_semantics=("parallel",),   # dual-TC on v7x when num_blocks > 1
            vmem_limit_bytes=vmem_limit,
        ),
        cost_estimate=cost,
    )(wt, encoder_output, keys)

    return attn_outputs, attn_weights


def _reference(encoder_output, given_keyphrases, attn_weight):
    mat1 = jnp.einsum("btd,od->bto", encoder_output, attn_weight)
    scores = jnp.einsum("bto,bso->bts", mat1, given_keyphrases)
    attn = jax.nn.softmax(scores, axis=-1)
    ctx = jnp.einsum("bts,bso->bto", attn, given_keyphrases)
    out = jnp.concatenate([ctx, encoder_output], axis=-1)
    return out, attn


if __name__ == "__main__":
    # Small shapes consistent with the module's forward pass.
    B, T, S = 2, 8, 8
    input_dim, output_dim = 32, 32

    key = jax.random.PRNGKey(0)
    k1, k2, k3 = jax.random.split(key, 3)

    encoder_output = jax.random.normal(k1, (B, T, input_dim), dtype=jnp.float32)
    given_keyphrases = jax.random.normal(k2, (B, S, output_dim), dtype=jnp.float32)
    encoder_padding_mask = jnp.zeros((B, S), dtype=jnp.float32)  # unused, as in PyTorch

    # Deterministic "parameter" for nn.Linear(input_dim, output_dim, bias=False):
    # PyTorch weight shape is (output_dim, input_dim).
    attn_weight = (jax.random.normal(k3, (output_dim, input_dim), dtype=jnp.float32)
                   * (1.0 / jnp.sqrt(input_dim)))

    # TODO(synk): self.output_proj is defined in __init__ but never used in forward(); omitted.

    attn_outputs, attn_weights = attention0_forward(
        encoder_output, given_keyphrases, encoder_padding_mask, attn_weight)
    jax.block_until_ready((attn_outputs, attn_weights))

    ref_out, ref_attn = _reference(encoder_output, given_keyphrases, attn_weight)
    assert attn_outputs.shape == ref_out.shape
    assert attn_weights.shape == ref_attn.shape
    assert jnp.allclose(attn_outputs, ref_out, atol=1e-5, rtol=1e-5)
    assert jnp.allclose(attn_weights, ref_attn, atol=1e-5, rtol=1e-5)

    print("KERNEL_OK")
</pallas_src>

<mosaic_0001>
module attributes {stable_mosaic.version = 11 : i64} {
  func.func @_attention0_kernel(%arg0: i32, %arg1: memref<32x32xf32, #tpu.memory_space<vmem>>, %arg2: memref<1x8x32xf32, #tpu.memory_space<vmem>>, %arg3: memref<1x8x32xf32, #tpu.memory_space<vmem>>, %arg4: memref<1x8x64xf32, #tpu.memory_space<vmem>>, %arg5: memref<1x8x8xf32, #tpu.memory_space<vmem>>) attributes {dimension_semantics = [#tpu.dimension_semantics<parallel>], iteration_bounds = array<i64: 2>, scalar_prefetch = 0 : i64, scratch_operands = 0 : i64, tpu.core_type = #tpu.core_type<tc>, window_params = [{pipeline_mode = #tpu.pipeline_mode<synchronous>, transform_indices = @transform_0, window_bounds = array<i64: 32, 32>}, {transform_indices = @transform_1, window_bounds = array<i64: 1, 8, 32>}, {transform_indices = @transform_2, window_bounds = array<i64: 1, 8, 32>}, {transform_indices = @transform_3, window_bounds = array<i64: 1, 8, 64>}, {transform_indices = @transform_4, window_bounds = array<i64: 1, 8, 8>}]} {
    %c0 = arith.constant 0 : index
    %c0_0 = arith.constant 0 : index
    %c0_1 = arith.constant 0 : index
    %0 = vector.load %arg2[%c0, %c0_0, %c0_1] : memref<1x8x32xf32, #tpu.memory_space<vmem>>, vector<1x8x32xf32>
    %c0_2 = arith.constant 0 : index
    %c0_3 = arith.constant 0 : index
    %1 = vector.load %arg1[%c0_2, %c0_3] : memref<32x32xf32, #tpu.memory_space<vmem>>, vector<32x32xf32>
    %c0_4 = arith.constant 0 : index
    %c0_5 = arith.constant 0 : index
    %c0_6 = arith.constant 0 : index
    %2 = vector.load %arg3[%c0_4, %c0_5, %c0_6] : memref<1x8x32xf32, #tpu.memory_space<vmem>>, vector<1x8x32xf32>
    %3 = vector.shape_cast %0 : vector<1x8x32xf32> to vector<8x32xf32>
    %cst = arith.constant dense<0.000000e+00> : vector<8x32xf32>
    %4 = tpu.matmul %3, %1, %cst {dimension_numbers = #tpu.dot_dimension_numbers<[1], [0], [0], [1], [0, 0, 1, 1], [], []>} : vector<8x32xf32>, vector<32x32xf32>, vector<8x32xf32> -> vector<8x32xf32>
    %5 = vector.shape_cast %4 : vector<8x32xf32> to vector<1x8x32xf32>
    "tpu.trace_start"() <{level = 10 : i32, message = "bto,bso->bts"}> : () -> ()
    %cst_7 = arith.constant dense<0.000000e+00> : vector<1x8x8xf32>
    %6 = tpu.matmul %5, %2, %cst_7 {dimension_numbers = #tpu.dot_dimension_numbers<[2], [2], [1], [1], [0, 0, 0, 1, 1, 1], [0], [0]>} : vector<1x8x32xf32>, vector<1x8x32xf32>, vector<1x8x8xf32> -> vector<1x8x8xf32>
    "tpu.trace_stop"() : () -> ()
    %cst_8 = arith.constant dense<0xFF800000> : vector<1x8xf32>
    %7 = vector.multi_reduction <maximumf>, %6, %cst_8 [2] : vector<1x8x8xf32> to vector<1x8xf32>
    %8 = vector.shape_cast %7 : vector<1x8xf32> to vector<1x8x1xf32>
    %9 = vector.broadcast %8 : vector<1x8x1xf32> to vector<1x8x8xf32>
    %10 = arith.subf %6, %9 : vector<1x8x8xf32>
    %11 = math.exp %10 : vector<1x8x8xf32>
    %cst_9 = arith.constant dense<0.000000e+00> : vector<1x8xf32>
    %12 = vector.multi_reduction <add>, %11, %cst_9 [2] : vector<1x8x8xf32> to vector<1x8xf32>
    %13 = vector.shape_cast %12 : vector<1x8xf32> to vector<1x8x1xf32>
    %14 = tpu.reciprocal %13 {approx = true} : vector<1x8x1xf32> -> vector<1x8x1xf32>
    %15 = arith.mulf %13, %14 : vector<1x8x1xf32>
    %cst_10 = arith.constant 2.000000e+00 : f32
    %16 = vector.broadcast %cst_10 : f32 to vector<1x8x1xf32>
    %17 = arith.subf %16, %15 : vector<1x8x1xf32>
    %18 = arith.mulf %14, %17 : vector<1x8x1xf32>
    %19 = vector.broadcast %18 : vector<1x8x1xf32> to vector<1x8x8xf32>
    %20 = arith.mulf %11, %19 : vector<1x8x8xf32>
    "tpu.trace_start"() <{level = 10 : i32, message = "bts,bso->bto"}> : () -> ()
    %cst_11 = arith.constant dense<0.000000e+00> : vector<1x8x32xf32>
    %21 = tpu.matmul %20, %2, %cst_11 {dimension_numbers = #tpu.dot_dimension_numbers<[2], [1], [1], [2], [0, 0, 0, 1, 1, 2], [0], [0]>} : vector<1x8x8xf32>, vector<1x8x32xf32>, vector<1x8x32xf32> -> vector<1x8x32xf32>
    "tpu.trace_stop"() : () -> ()
    %c0_12 = arith.constant 0 : index
    %c0_13 = arith.constant 0 : index
    %c0_14 = arith.constant 0 : index
    %22 = vector.load %arg4[%c0_12, %c0_13, %c0_14] : memref<1x8x64xf32, #tpu.memory_space<vmem>>, vector<1x8x32xf32>
    tpu.vector_store %arg4[%c0_12, %c0_13, %c0_14], %21 {strides = array<i32>} : memref<1x8x64xf32, #tpu.memory_space<vmem>>, vector<1x8x32xf32>,
    %c0_15 = arith.constant 0 : index
    %c0_16 = arith.constant 0 : index
    %c32 = arith.constant 32 : index
    %23 = vector.load %arg4[%c0_15, %c0_16, %c32] : memref<1x8x64xf32, #tpu.memory_space<vmem>>, vector<1x8x32xf32>
    tpu.vector_store %arg4[%c0_15, %c0_16, %c32], %0 {strides = array<i32>} : memref<1x8x64xf32, #tpu.memory_space<vmem>>, vector<1x8x32xf32>,
    %c0_17 = arith.constant 0 : index
    %c0_18 = arith.constant 0 : index
    %c0_19 = arith.constant 0 : index
    %24 = vector.load %arg5[%c0_17, %c0_18, %c0_19] : memref<1x8x8xf32, #tpu.memory_space<vmem>>, vector<1x8x8xf32>
    tpu.vector_store %arg5[%c0_17, %c0_18, %c0_19], %20 {strides = array<i32>} : memref<1x8x8xf32, #tpu.memory_space<vmem>>, vector<1x8x8xf32>,
    return
  }
  func.func @transform_0(%arg0: i32) -> (i32, i32) {
    %c0_i32 = arith.constant 0 : i32
    %c0_i32_0 = arith.constant 0 : i32
    %c0_i32_1 = arith.constant 0 : i32
    return %c0_i32, %c0_i32_0 : i32, i32
  }
  func.func @transform_1(%arg0: i32) -> (i32, i32, i32) {
    %c0_i32 = arith.constant 0 : i32
    %c0_i32_0 = arith.constant 0 : i32
    %c0_i32_1 = arith.constant 0 : i32
    return %arg0, %c0_i32, %c0_i32_0 : i32, i32, i32
  }
  func.func @transform_2(%arg0: i32) -> (i32, i32, i32) {
    %c0_i32 = arith.constant 0 : i32
    %c0_i32_0 = arith.constant 0 : i32
    %c0_i32_1 = arith.constant 0 : i32
    return %arg0, %c0_i32, %c0_i32_0 : i32, i32, i32
  }
  func.func @transform_3(%arg0: i32) -> (i32, i32, i32) {
    %c0_i32 = arith.constant 0 : i32
    %c0_i32_0 = arith.constant 0 : i32
    %c0_i32_1 = arith.constant 0 : i32
    return %arg0, %c0_i32, %c0_i32_0 : i32, i32, i32
  }
  func.func @transform_4(%arg0: i32) -> (i32, i32, i32) {
    %c0_i32 = arith.constant 0 : i32
    %c0_i32_0 = arith.constant 0 : i32
    %c0_i32_1 = arith.constant 0 : i32
    return %arg0, %c0_i32, %c0_i32_0 : i32, i32, i32
  }
}

</mosaic_0001>

<llo_original>
// kernel: tpu_custom_call.1
$region0: #{tpu_custom_call.1}
  #allocation0 [shape = 'u32[]', space=smem, size = 0x4, offset = 0x4, fixed_abs, tag = 'smem constant byte address 0x4 - core index']
  #allocation1 [shape = 'u32[144,128]{1,0:T(1,128)}', space=vmem, size = 0x12000, scoped, tag = 'internal scratch']
  %s0 = inlined_call_operand.hbm [shape: f32[32,32], index: 0, kind: input, shape index: {}]
  %s1 = inlined_call_operand.hbm [shape: f32[2,8,32], index: 1, kind: input, shape index: {}]
  %s2 = inlined_call_operand.hbm [shape: f32[2,8,32], index: 2, kind: input, shape index: {}]
  %s3 = inlined_call_operand.hbm [shape: f32[2,8,64], index: 3, kind: output, shape index: {0}]
  %s4 = inlined_call_operand.hbm [shape: f32[2,8,8], index: 4, kind: output, shape index: {1}]
  %5 = xla_tuple %s3, %s4
  %s6 = sld [smem:[#allocation0]]
  $region65: #{tpu_custom_call.1} parent=0
    _
  %s8 = ssub.s32 1, %s6
  %s9 = scalar_select 0, %s8, %s6
  $region1: #{tpu_custom_call.1} parent=0
    #allocation2 [shape = 'u8[16384]{0}', space=vmem, size = 0x4000, scoped, tag = 'input window, operand 0, single buffered']
    #allocation3 [shape = 's32[2]{0}', space=sflag, size = 0x8, scoped, tag = 'scoped memory for tpu_custom_call.1']
    #allocation4 [shape = 's32[2]{0}', space=sflag, size = 0x8, scoped, tag = 'scoped memory for tpu_custom_call.1']
    #allocation5 [shape = 'u8[8192]{0}', space=vmem, size = 0x2000, scoped, tag = 'input window, operand 1']
    #allocation6 [shape = 's32[2]{0}', space=sflag, size = 0x8, scoped, tag = 'scoped memory for tpu_custom_call.1']
    #allocation7 [shape = 'u8[8192]{0}', space=vmem, size = 0x2000, scoped, tag = 'input window, operand 2']
    #allocation8 [shape = 'u8[8192]{0}', space=vmem, size = 0x2000, scoped, tag = 'output window, operand 0']
    #allocation9 [shape = 'u8[8192]{0}', space=vmem, size = 0x2000, scoped, tag = 'output window, operand 1']
    #allocation10 [shape = 's32[2]{0}', space=sflag, size = 0x8, scoped, tag = 'scoped memory for tpu_custom_call.1']
    %10 = vsyncpa [#allocation3], 0
    %11 = vsyncpa [#allocation6], 0
    %s12 = scalar_lea.sflag [#allocation6], 1
    %13 = vsyncpa %s12, 0
    %14 = vsyncpa [#allocation4], 0
    %s15 = scalar_lea.sflag [#allocation4], 1
    %16 = vsyncpa %s15, 0
    %17 = vsyncpa [#allocation10], 0
    %s18 = scalar_lea.sflag [#allocation10], 1
    %19 = vsyncpa %s18, 0
    loop: start=0, step=1, limit=4
    $region2: #{tpu_custom_call.1} parent=1 // loop_pre_header
      _
    $region3: #{tpu_custom_call.1} parent=1 // loop_header
      %s21 = sphi 0, %s25
      %p22 = scmp.ge.s32.totalorder %s21, 4
      %s29 = sphi 0, %s29
      %s31 = sphi 0, %s29
      %s32 = sphi 0, %s31
      %s46 = sphi 0, %s32
      %s52 = sphi 0, %s54
      %s55 = sphi 0, %s52
      %s56 = sphi 0, %s55
      %s72 = sphi 0, %s56
      %s78 = sphi 0, %s80
      %s81 = sphi 0, %s78
      %s82 = sphi 0, %s81
      %s98 = sphi 0, %s82
      %s104 = sphi 0, %s106
      %s107 = sphi 0, %s104
      %s108 = sphi 0, %s107
      %s124 = sphi 0, %s108
      %s130 = sphi 0, %s132
      %s133 = sphi 0, %s130
      %s134 = sphi 0, %s133
      %s150 = sphi 0, %s134
    $region4: #{tpu_custom_call.1} parent=1 // loop_header_branch
      %24 = sbr.rel (%p22) target = $region8
    $region5: #{tpu_custom_call.1} parent=1 // loop_body
      %s26 = ssub.s32 %s21, 1
      %s27 = ssub.s32 %s21, 2
      %s28 = sadd.s32 %s21, 1
      %s30 = sadd.s32 %s29, 1
      %p33 = scmp.eq.s32.totalorder %s21, 1
      %p34 = scmp.ne.s32.totalorder %s29, %s31
      %p35 = scmp.eq.s32.totalorder %s21, 0
      %p36 = por %p34, %p35
      %p37 = scmp.ne.s32.totalorder %s29, %s31
      %p38 = scmp.eq.s32.totalorder %s26, 1
      %p39 = por %p37, %p38
      %p40 = scmp.ne.s32.totalorder %s31, %s32
      %p41 = scmp.eq.s32.totalorder %s26, 0
      %p42 = por %p40, %p41
      %p43 = scmp.ne.s32.totalorder %s31, %s32
      %p44 = scmp.eq.s32.totalorder %s27, 1
      %p45 = por %p43, %p44
      %p47 = scmp.ne.s32.totalorder %s32, %s46
      %p48 = scmp.eq.s32.totalorder %s27, 0
      %p49 = por %p47, %p48
      %s50 = ssub.s32 %s21, %s28
      %p51 = scmp.eq.s32.totalorder %s50, 0
      %s53 = sadd.s32 %s52, 1
      %s54 = scalar_select %p51, %s52, %s53
      %p57 = pneg %p51
      %p58 = scmp.eq.s32.totalorder %s21, 1
      %p59 = por %p57, %p58
      %p60 = scmp.ne.s32.totalorder %s52, %s55
      %p61 = scmp.eq.s32.totalorder %s21, 0
      %p62 = por %p60, %p61
      %p63 = scmp.ne.s32.totalorder %s52, %s55
      %p64 = scmp.eq.s32.totalorder %s26, 1
      %p65 = por %p63, %p64
      %p66 = scmp.ne.s32.totalorder %s55, %s56
      %p67 = scmp.eq.s32.totalorder %s26, 0
      %p68 = por %p66, %p67
      %p69 = scmp.ne.s32.totalorder %s55, %s56
      %p70 = scmp.eq.s32.totalorder %s27, 1
      %p71 = por %p69, %p70
      %p73 = scmp.ne.s32.totalorder %s56, %s72
      %p74 = scmp.eq.s32.totalorder %s27, 0
      %p75 = por %p73, %p74
      %s76 = ssub.s32 %s21, %s28
      %p77 = scmp.eq.s32.totalorder %s76, 0
      %s79 = sadd.s32 %s78, 1
      %s80 = scalar_select %p77, %s78, %s79
      %p83 = pneg %p77
      %p84 = scmp.eq.s32.totalorder %s21, 1
      %p85 = por %p83, %p84
      %p86 = scmp.ne.s32.totalorder %s78, %s81
      %p87 = scmp.eq.s32.totalorder %s21, 0
      %p88 = por %p86, %p87
      %p89 = scmp.ne.s32.totalorder %s78, %s81
      %p90 = scmp.eq.s32.totalorder %s26, 1
      %p91 = por %p89, %p90
      %p92 = scmp.ne.s32.totalorder %s81, %s82
      %p93 = scmp.eq.s32.totalorder %s26, 0
      %p94 = por %p92, %p93
      %p95 = scmp.ne.s32.totalorder %s81, %s82
      %p96 = scmp.eq.s32.totalorder %s27, 1
      %p97 = por %p95, %p96
      %p99 = scmp.ne.s32.totalorder %s82, %s98
      %p100 = scmp.eq.s32.totalorder %s27, 0
      %p101 = por %p99, %p100
      %s102 = ssub.s32 %s21, %s28
      %p103 = scmp.eq.s32.totalorder %s102, 0
      %s105 = sadd.s32 %s104, 1
      %s106 = scalar_select %p103, %s104, %s105
      %p109 = pneg %p103
      %p110 = scmp.eq.s32.totalorder %s21, 1
      %p111 = por %p109, %p110
      %p112 = scmp.ne.s32.totalorder %s104, %s107
      %p113 = scmp.eq.s32.totalorder %s21, 0
      %p114 = por %p112, %p113
      %p115 = scmp.ne.s32.totalorder %s104, %s107
      %p116 = scmp.eq.s32.totalorder %s26, 1
      %p117 = por %p115, %p116
      %p118 = scmp.ne.s32.totalorder %s107, %s108
      %p119 = scmp.eq.s32.totalorder %s26, 0
      %p120 = por %p118, %p119
      %p121 = scmp.ne.s32.totalorder %s107, %s108
      %p122 = scmp.eq.s32.totalorder %s27, 1
      %p123 = por %p121, %p122
      %p125 = scmp.ne.s32.totalorder %s108, %s124
      %p126 = scmp.eq.s32.totalorder %s27, 0
      %p127 = por %p125, %p126
      %s128 = ssub.s32 %s21, %s28
      %p129 = scmp.eq.s32.totalorder %s128, 0
      %s131 = sadd.s32 %s130, 1
      %s132 = scalar_select %p129, %s130, %s131
      %p135 = pneg %p129
      %p136 = scmp.eq.s32.totalorder %s21, 1
      %p137 = por %p135, %p136
      %p138 = scmp.ne.s32.totalorder %s130, %s133
      %p139 = scmp.eq.s32.totalorder %s21, 0
      %p140 = por %p138, %p139
      %p141 = scmp.ne.s32.totalorder %s130, %s133
      %p142 = scmp.eq.s32.totalorder %s26, 1
      %p143 = por %p141, %p142
      %p144 = scmp.ne.s32.totalorder %s133, %s134
      %p145 = scmp.eq.s32.totalorder %s26, 0
      %p146 = por %p144, %p145
      %p147 = scmp.ne.s32.totalorder %s133, %s134
      %p148 = scmp.eq.s32.totalorder %s27, 1
      %p149 = por %p147, %p148
      %p151 = scmp.ne.s32.totalorder %s134, %s150
      %p152 = scmp.eq.s32.totalorder %s27, 0
      %p153 = por %p151, %p152
      %p154 = scmp.le.s32.totalorder 1, %s21
      %p155 = scmp.lt.s32.totalorder %s21, 3
      %p156 = pnand %p154, %p155
      %p157 = pneg %p156
      // Predicated region
      $region9: #{tpu_custom_call.1} parent=5 // pred_check
        _
      $region10: #{tpu_custom_call.1} parent=5 // pred_check_branch
        %159 = sbr.rel (%p156) target = $region12
      $region11: #{tpu_custom_call.1} parent=5 // pred_region
        %s160 = ssub.s32 %s21, 1
        // Predicated region
        $region13: #{tpu_custom_call.1} parent=11 // pred_check
          %p161 = pneg %p42
        $region14: #{tpu_custom_call.1} parent=11 // pred_check_branch
          %163 = sbr.rel (%p161) target = $region16
        $region15: #{tpu_custom_call.1} parent=11 // pred_region
          %s165 = ssub.s32 512, 512
          %166 = vsyncadd [#allocation3], %s165
          %s167 = sshll.u32 [#allocation2], 4
          %s168 = int_to_ptr.vmem [resolvable:$true] %s167
          %173 = dma.hbm_to_vmem [thread:$0]  %s0, 512, %s168, [#allocation3], 128, 128, 8
        $region16: #{tpu_custom_call.1} parent=11 // pred_fallthru
          _
      $region12: #{tpu_custom_call.1} parent=5 // pred_fallthru
        _
      %p174 = scmp.lt.s32.totalorder %s21, 2
      // Predicated region
      $region17: #{tpu_custom_call.1} parent=5 // pred_check
        %p175 = pneg %p174
      $region18: #{tpu_custom_call.1} parent=5 // pred_check_branch
        %177 = sbr.rel (%p175) target = $region20
      $region19: #{tpu_custom_call.1} parent=5 // pred_region
        // Predicated region
        $region21: #{tpu_custom_call.1} parent=19 // pred_check
          %p178 = pneg %p62
        $region22: #{tpu_custom_call.1} parent=19 // pred_check_branch
          %180 = sbr.rel (%p178) target = $region24
        $region23: #{tpu_custom_call.1} parent=19 // pred_region
          %s181 = sand.u32 %s21, 1
          %s182 = scalar_lea.sflag [#allocation6], %s181
          %s183 = sand.u32 %s52, 1
          %s184 = smul.addr %s183, 8
          %s185 = scalar_lea.vmem [#allocation5], %s184
          %s187 = ssub.s32 128, 128
          %188 = vsyncadd %s182, %s187
          %s189 = smul.addr %s21, 128
          %s190 = scalar_lea.hbm %s1, %s189
          %s192 = sshll.u32 %s185, 4
          %s193 = int_to_ptr.vmem [resolvable:$true] %s192
          %195 = dma.hbm_to_vmem [thread:$0]  %s190, 128, %s193, %s182
        $region24: #{tpu_custom_call.1} parent=19 // pred_fallthru
          _
        // Predicated region
        $region25: #{tpu_custom_call.1} parent=19 // pred_check
          %p196 = pneg %p88
        $region26: #{tpu_custom_call.1} parent=19 // pred_check_branch
          %198 = sbr.rel (%p196) target = $region28
        $region27: #{tpu_custom_call.1} parent=19 // pred_region
          %s199 = sand.u32 %s21, 1
          %s200 = scalar_lea.sflag [#allocation6], %s199
          %s201 = sand.u32 %s78, 1
          %s202 = smul.addr %s201, 8
          %s203 = scalar_lea.vmem [#allocation7], %s202
          %s205 = ssub.s32 128, 128
          %206 = vsyncadd %s200, %s205
          %s207 = smul.addr %s21, 128
          %s208 = scalar_lea.hbm %s2, %s207
          %s210 = sshll.u32 %s203, 4
          %s211 = int_to_ptr.vmem [resolvable:$true] %s210
          %213 = dma.hbm_to_vmem [thread:$0]  %s208, 128, %s211, %s200
        $region28: #{tpu_custom_call.1} parent=19 // pred_fallthru
          _
      $region20: #{tpu_custom_call.1} parent=5 // pred_fallthru
        _
      %p214 = scmp.le.s32.totalorder 1, %s21
      %p215 = scmp.lt.s32.totalorder %s21, 3
      %p216 = pnand %p214, %p215
      %p217 = pneg %p216
      // Predicated region
      $region29: #{tpu_custom_call.1} parent=5 // pred_check
        _
      $region30: #{tpu_custom_call.1} parent=5 // pred_check_branch
        %219 = sbr.rel (%p216) target = $region32
      $region31: #{tpu_custom_call.1} parent=5 // pred_region
        %s220 = ssub.s32 %s21, 1
        // Predicated region
        $region33: #{tpu_custom_call.1} parent=31 // pred_check
          %p221 = pneg %p42
        $region34: #{tpu_custom_call.1} parent=31 // pred_check_branch
          %223 = sbr.rel (%p221) target = $region36
        $region35: #{tpu_custom_call.1} parent=31 // pred_region
          %224 = dma.done [#allocation3], 512
        $region36: #{tpu_custom_call.1} parent=31 // pred_fallthru
          _
        %s225 = sand.u32 %s26, 1
        %s226 = scalar_lea.sflag [#allocation6], %s225
        %s227 = sand.u32 %s55, 1
        %s228 = smul.addr %s227, 8
        %s229 = scalar_lea.vmem [#allocation5], %s228
        // Predicated region
        $region37: #{tpu_custom_call.1} parent=31 // pred_check
          %p230 = pneg %p68
        $region38: #{tpu_custom_call.1} parent=31 // pred_check_branch
          %232 = sbr.rel (%p230) target = $region40
        $region39: #{tpu_custom_call.1} parent=31 // pred_region
          %233 = dma.done %s226, 128
        $region40: #{tpu_custom_call.1} parent=31 // pred_fallthru
          _
        %s234 = sand.u32 %s26, 1
        %s235 = scalar_lea.sflag [#allocation6], %s234
        %s236 = sand.u32 %s81, 1
        %s237 = smul.addr %s236, 8
        %s238 = scalar_lea.vmem [#allocation7], %s237
        // Predicated region
        $region41: #{tpu_custom_call.1} parent=31 // pred_check
          %p239 = pneg %p94
        $region42: #{tpu_custom_call.1} parent=31 // pred_check_branch
          %241 = sbr.rel (%p239) target = $region44
        $region43: #{tpu_custom_call.1} parent=31 // pred_region
          %242 = dma.done %s235, 128
        $region44: #{tpu_custom_call.1} parent=31 // pred_fallthru
          _
        %p243 = pneg %p42
        %p244 = pneg %p39
        %s245 = sand.u32 %s26, 1
        %s246 = scalar_lea.sflag [#allocation6], %s245
        %s247 = sand.u32 %s55, 1
        %s248 = smul.addr %s247, 8
        %s249 = scalar_lea.vmem [#allocation5], %s248
        %p250 = pneg %p68
        %p251 = pneg %p65
        %s252 = sand.u32 %s26, 1
        %s253 = scalar_lea.sflag [#allocation6], %s252
        %s254 = sand.u32 %s81, 1
        %s255 = smul.addr %s254, 8
        %s256 = scalar_lea.vmem [#allocation7], %s255
        %p257 = pneg %p94
        %p258 = pneg %p91
        %p259 = pneg %p120
        %p260 = pneg %p117
        %s261 = sand.u32 %s107, 1
        %s262 = scalar_lea.sflag [#allocation4], %s261
        %s263 = sand.u32 %s107, 1
        %s264 = smul.addr %s263, 8
        %s265 = scalar_lea.vmem [#allocation8], %s264
        %p266 = pneg %p146
        %p267 = pneg %p143
        %s268 = sand.u32 %s133, 1
        %s269 = scalar_lea.sflag [#allocation10], %s268
        %s270 = sand.u32 %s133, 1
        %s271 = smul.addr %s270, 8
        %s272 = scalar_lea.vmem [#allocation9], %s271
        %v273 = vld [vmem:[%s229] sm:$0xff]
        %v274 = vld [vmem:[#allocation2] sm:$0xff]
        %v275 = vld [vmem:[#allocation2 + $0x8] sm:$0xff]
        %v276 = vld [vmem:[#allocation2 + $0x10] sm:$0xff]
        %v277 = vld [vmem:[#allocation2 + $0x18] sm:$0xff]
        %v278 = vld [vmem:[%s238] sm:$0xff]
        %vm279 = vcmask 261120
        %v281 = vsel %vm279, %v273, 0
        %283 = vmatprep.subr.mxu0 0.0
        %284 = vmatpush1.msra.mxu0 %v274
        %285 = vmatprep.subr.mxu0 0.0
        %286 = vmatpush1.msra.mxu0 %v275
        %287 = vmatprep.subr.mxu0 0.0
        %288 = vmatpush1.msra.mxu0 %v276
        %289 = vmatprep.subr.mxu0 0.0
        %290 = vmatpush1.msra.mxu0 %v277
        %291 = vmatprep.subr.mxu0 0.0
        %292 = vmatpush1.msra.mxu0 0.0
        %293 = vmatprep.subr.mxu0 0.0
        %294 = vmatpush1.msra.mxu0 0.0
        %295 = vmatprep.subr.mxu0 0.0
        %296 = vmatpush1.msra.mxu0 0.0
        %297 = vmatprep.subr.mxu0 0.0
        %298 = vmatpush1.msra.mxu0 0.0
        %299 = vmatprep.subr.mxu0 0.0
        %300 = vmatpush1.msra.mxu0 0.0
        %301 = vmatprep.subr.mxu0 0.0
        %302 = vmatpush1.msra.mxu0 0.0
        %303 = vmatprep.subr.mxu0 0.0
        %304 = vmatpush1.msra.mxu0 0.0
        %305 = vmatprep.subr.mxu0 0.0
        %306 = vmatpush1.msra.mxu0 0.0
        %307 = vmatprep.subr.mxu0 0.0
        %308 = vmatpush1.msra.mxu0 0.0
        %309 = vmatprep.subr.mxu0 0.0
        %310 = vmatpush1.msra.mxu0 0.0
        %311 = vmatprep.subr.mxu0 0.0
        %312 = vmatpush1.msra.mxu0 0.0
        %313 = vmatprep.subr.mxu0 0.0
        %314 = vmatpush1.msra.mxu0 0.0
        %315 = vmatprep.subr.mxu0 0.0
        %316 = vmatpush1.msra.mxu0 0.0
        %317 = vmatprep.subr.mxu0 0.0
        %318 = vmatpush1.msra.mxu0 0.0
        %319 = vmatprep.subr.mxu0 0.0
        %320 = vmatpush1.msra.mxu0 0.0
        %321 = vmatprep.subr.mxu0 0.0
        %322 = vmatpush1.msra.mxu0 0.0
        %323 = vmatprep.subr.mxu0 0.0
        %324 = vmatpush1.msra.mxu0 0.0
        %325 = vmatprep.subr.mxu0 0.0
        %326 = vmatpush1.msra.mxu0 0.0
        %327 = vmatprep.subr.mxu0 0.0
        %328 = vmatpush1.msra.mxu0 0.0
        %329 = vmatprep.subr.mxu0 0.0
        %330 = vmatpush1.msra.mxu0 0.0
        %331 = vmatprep.subr.mxu0 0.0
        %332 = vmatpush1.msra.mxu0 0.0
        %333 = vmatprep.subr.mxu0 0.0
        %334 = vmatpush1.msra.mxu0 0.0
        %335 = vmatprep.subr.mxu0 0.0
        %336 = vmatpush1.msra.mxu0 0.0
        %337 = vmatprep.subr.mxu0 0.0
        %338 = vmatpush1.msra.mxu0 0.0
        %339 = vmatprep.subr.mxu0 0.0
        %340 = vmatpush1.msra.mxu0 0.0
        %341 = vmatprep.subr.mxu0 0.0
        %342 = vmatpush1.msra.mxu0 0.0
        %343 = vmatprep.subr.mxu0 0.0
        %344 = vmatpush1.msra.mxu0 0.0
        %345 = vmatprep.subr.mxu0 0.0
        %346 = vmatpush1.msra.mxu0 0.0
        %347 = vmatprep.mubr.f32.mxu0 0.0
        %348 = vmatmul.mubr.f32.gmra.mrb[0].mxu0 %v281
        %v349 = vpop.f32.mrb[0].mxu0
        %v350 = vadd.f32 0.0, %v349
        %v351 = vpop.f32.mrb[0].mxu0
        %352 = vdwg.mxu0
        %v354 = vsel %vm279, %v350, 0
        %v357 = vsel %vm279, %v278, 0
        %359 = vmatprep.subr.mxu0 0.0
        %360 = vmatpush1.xpose.msra.mxu0 %v357
        %361 = vmatprep.subr.mxu0 0.0
        %362 = vmatpush1.xpose.msra.mxu0 0.0
        %363 = vmatprep.subr.mxu0 0.0
        %364 = vmatpush1.xpose.msra.mxu0 0.0
        %365 = vmatprep.subr.mxu0 0.0
        %366 = vmatpush1.xpose.msra.mxu0 0.0
        %367 = vmatprep.subr.mxu0 0.0
        %368 = vmatpush1.xpose.msra.mxu0 0.0
        %369 = vmatprep.subr.mxu0 0.0
        %370 = vmatpush1.xpose.msra.mxu0 0.0
        %371 = vmatprep.subr.mxu0 0.0
        %372 = vmatpush1.xpose.msra.mxu0 0.0
        %373 = vmatprep.subr.mxu0 0.0
        %374 = vmatpush1.xpose.msra.mxu0 0.0
        %375 = vmatprep.subr.mxu0 0.0
        %376 = vmatpush1.xpose.msra.mxu0 0.0
        %377 = vmatprep.subr.mxu0 0.0
        %378 = vmatpush1.xpose.msra.mxu0 0.0
        %379 = vmatprep.subr.mxu0 0.0
        %380 = vmatpush1.xpose.msra.mxu0 0.0
        %381 = vmatprep.subr.mxu0 0.0
        %382 = vmatpush1.xpose.msra.mxu0 0.0
        %383 = vmatprep.subr.mxu0 0.0
        %384 = vmatpush1.xpose.msra.mxu0 0.0
        %385 = vmatprep.subr.mxu0 0.0
        %386 = vmatpush1.xpose.msra.mxu0 0.0
        %387 = vmatprep.subr.mxu0 0.0
        %388 = vmatpush1.xpose.msra.mxu0 0.0
        %389 = vmatprep.subr.mxu0 0.0
        %390 = vmatpush1.xpose.msra.mxu0 0.0
        %391 = vmatprep.subr.mxu0 0.0
        %392 = vmatpush1.xpose.msra.mxu0 0.0
        %393 = vmatprep.subr.mxu0 0.0
        %394 = vmatpush1.xpose.msra.mxu0 0.0
        %395 = vmatprep.subr.mxu0 0.0
        %396 = vmatpush1.xpose.msra.mxu0 0.0
        %397 = vmatprep.subr.mxu0 0.0
        %398 = vmatpush1.xpose.msra.mxu0 0.0
        %399 = vmatprep.subr.mxu0 0.0
        %400 = vmatpush1.xpose.msra.mxu0 0.0
        %401 = vmatprep.subr.mxu0 0.0
        %402 = vmatpush1.xpose.msra.mxu0 0.0
        %403 = vmatprep.subr.mxu0 0.0
        %404 = vmatpush1.xpose.msra.mxu0 0.0
        %405 = vmatprep.subr.mxu0 0.0
        %406 = vmatpush1.xpose.msra.mxu0 0.0
        %407 = vmatprep.subr.mxu0 0.0
        %408 = vmatpush1.xpose.msra.mxu0 0.0
        %409 = vmatprep.subr.mxu0 0.0
        %410 = vmatpush1.xpose.msra.mxu0 0.0
        %411 = vmatprep.subr.mxu0 0.0
        %412 = vmatpush1.xpose.msra.mxu0 0.0
        %413 = vmatprep.subr.mxu0 0.0
        %414 = vmatpush1.xpose.msra.mxu0 0.0
        %415 = vmatprep.subr.mxu0 0.0
        %416 = vmatpush1.xpose.msra.mxu0 0.0
        %417 = vmatprep.subr.mxu0 0.0
        %418 = vmatpush1.xpose.msra.mxu0 0.0
        %419 = vmatprep.subr.mxu0 0.0
        %420 = vmatpush1.xpose.msra.mxu0 0.0
        %421 = vmatprep.subr.mxu0 0.0
        %422 = vmatpush1.xpose.msra.mxu0 0.0
        %423 = vmatprep.mubr.f32.mxu0 0.0
        %424 = vmatmul.mubr.f32.gmra.mrb[0].mxu0 %v354
        %v425 = vpop.f32.mrb[0].mxu0
        %v426 = vadd.f32 0.0, %v425
        %v427 = vpop.f32.mrb[0].mxu0
        %428 = vdwg.mxu0
        %vm429 = vcmask 64512
        %v430 = vsel %vm429, %v426, -inf
        %431 = vmax.xlane.f32.xlu0 %v430
        %v432 = vpop.xlane.xlu0 %431
        %v433 = vsub.f32 %v426, %v432
        %v434 = vmul.f32 %v433, 1.442695
        %v435 = vpow.pop %v434
        %v436 = vsel %vm429, %v435, 0.0
        %437 = vadd.xlane.f32.xlu0 %v436
        %v438 = vpop.xlane.xlu0 %437
        %v439 = vrcp.pop %v438
        %v440 = vmul.f32 %v438, %v439
        %v441 = vsub.f32 2.0, %v440
        %v442 = vmul.f32 %v439, %v441
        %v443 = vmul.f32 %v435, %v442
        %v445 = vsel %vm429, %v443, 0
        %447 = vmatprep.subr.mxu0 0.0
        %448 = vmatpush1.msra.mxu0 %v278
        %449 = vmatprep.subr.mxu0 0.0
        %450 = vmatpush1.msra.mxu0 0.0
        %451 = vmatprep.subr.mxu0 0.0
        %452 = vmatpush1.msra.mxu0 0.0
        %453 = vmatprep.subr.mxu0 0.0
        %454 = vmatpush1.msra.mxu0 0.0
        %455 = vmatprep.subr.mxu0 0.0
        %456 = vmatpush1.msra.mxu0 0.0
        %457 = vmatprep.subr.mxu0 0.0
        %458 = vmatpush1.msra.mxu0 0.0
        %459 = vmatprep.subr.mxu0 0.0
        %460 = vmatpush1.msra.mxu0 0.0
        %461 = vmatprep.subr.mxu0 0.0
        %462 = vmatpush1.msra.mxu0 0.0
        %463 = vmatprep.subr.mxu0 0.0
        %464 = vmatpush1.msra.mxu0 0.0
        %465 = vmatprep.subr.mxu0 0.0
        %466 = vmatpush1.msra.mxu0 0.0
        %467 = vmatprep.subr.mxu0 0.0
        %468 = vmatpush1.msra.mxu0 0.0
        %469 = vmatprep.subr.mxu0 0.0
        %470 = vmatpush1.msra.mxu0 0.0
        %471 = vmatprep.subr.mxu0 0.0
        %472 = vmatpush1.msra.mxu0 0.0
        %473 = vmatprep.subr.mxu0 0.0
        %474 = vmatpush1.msra.mxu0 0.0
        %475 = vmatprep.subr.mxu0 0.0
        %476 = vmatpush1.msra.mxu0 0.0
        %477 = vmatprep.subr.mxu0 0.0
        %478 = vmatpush1.msra.mxu0 0.0
        %479 = vmatprep.subr.mxu0 0.0
        %480 = vmatpush1.msra.mxu0 0.0
        %481 = vmatprep.subr.mxu0 0.0
        %482 = vmatpush1.msra.mxu0 0.0
        %483 = vmatprep.subr.mxu0 0.0
        %484 = vmatpush1.msra.mxu0 0.0
        %485 = vmatprep.subr.mxu0 0.0
        %486 = vmatpush1.msra.mxu0 0.0
        %487 = vmatprep.subr.mxu0 0.0
        %488 = vmatpush1.msra.mxu0 0.0
        %489 = vmatprep.subr.mxu0 0.0
        %490 = vmatpush1.msra.mxu0 0.0
        %491 = vmatprep.subr.mxu0 0.0
        %492 = vmatpush1.msra.mxu0 0.0
        %493 = vmatprep.subr.mxu0 0.0
        %494 = vmatpush1.msra.mxu0 0.0
        %495 = vmatprep.subr.mxu0 0.0
        %496 = vmatpush1.msra.mxu0 0.0
        %497 = vmatprep.subr.mxu0 0.0
        %498 = vmatpush1.msra.mxu0 0.0
        %499 = vmatprep.subr.mxu0 0.0
        %500 = vmatpush1.msra.mxu0 0.0
        %501 = vmatprep.subr.mxu0 0.0
        %502 = vmatpush1.msra.mxu0 0.0
        %503 = vmatprep.subr.mxu0 0.0
        %504 = vmatpush1.msra.mxu0 0.0
        %505 = vmatprep.subr.mxu0 0.0
        %506 = vmatpush1.msra.mxu0 0.0
        %507 = vmatprep.subr.mxu0 0.0
        %508 = vmatpush1.msra.mxu0 0.0
        %509 = vmatprep.subr.mxu0 0.0
        %510 = vmatpush1.msra.mxu0 0.0
        %511 = vmatprep.mubr.f32.mxu0 0.0
        %512 = vmatmul.mubr.f32.gmra.mrb[0].mxu0 %v445
        %v513 = vpop.f32.mrb[0].mxu0
        %v514 = vadd.f32 0.0, %v513
        %v515 = vpop.f32.mrb[0].mxu0
        %516 = vdwg.mxu0
        %517 = vst.msk [vmem:[%s265] sm:$0xff] %vm279, %v514
        %518 = vrot.lane.b32.xlu0 %v273, 32
        %v519 = vpop.permute.xlu0 %518
        %vm521 = vcmask 523520
        %522 = vst.msk [vmem:[%s265] sm:$0xff] %vm521, %v519
        %523 = vst.msk [vmem:[%s272] sm:$0xff] %vm429, %v443
        %s524 = sand.u32 %s107, 1
        %s525 = scalar_lea.sflag [#allocation4], %s524
        %s526 = sand.u32 %s107, 1
        %s527 = smul.addr %s526, 8
        %s528 = scalar_lea.vmem [#allocation8], %s527
        %s529 = sand.u32 %s133, 1
        %s530 = scalar_lea.sflag [#allocation10], %s529
        %s531 = sand.u32 %s133, 1
        %s532 = smul.addr %s531, 8
        %s533 = scalar_lea.vmem [#allocation9], %s532
        // Predicated region
        $region45: #{tpu_custom_call.1} parent=31 // pred_check
          %p534 = pneg %p117
        $region46: #{tpu_custom_call.1} parent=31 // pred_check_branch
          %536 = sbr.rel (%p534) target = $region48
        $region47: #{tpu_custom_call.1} parent=31 // pred_region
          %s538 = ssub.s32 128, 128
          %539 = vsyncadd %s525, %s538
          %s540 = smul.addr %s26, 128
          %s541 = scalar_lea.hbm %s3, %s540
          %s543 = sshll.u32 %s528, 4
          %s544 = int_to_ptr.vmem [resolvable:$true] %s543
          %546 = dma.vmem_to_hbm [thread:$0]  %s544, 128, %s541, %s525
        $region48: #{tpu_custom_call.1} parent=31 // pred_fallthru
          _
        // Predicated region
        $region49: #{tpu_custom_call.1} parent=31 // pred_check
          %p547 = pneg %p143
        $region50: #{tpu_custom_call.1} parent=31 // pred_check_branch
          %549 = sbr.rel (%p547) target = $region52
        $region51: #{tpu_custom_call.1} parent=31 // pred_region
          %s551 = ssub.s32 128, 128
          %552 = vsyncadd %s530, %s551
          %s553 = smul.addr %s26, 128
          %s554 = scalar_lea.hbm %s4, %s553
          %s556 = sshll.u32 %s533, 4
          %s557 = int_to_ptr.vmem [resolvable:$true] %s556
          %559 = dma.vmem_to_hbm [thread:$0]  %s557, 128, %s554, %s530
        $region52: #{tpu_custom_call.1} parent=31 // pred_fallthru
          _
      $region32: #{tpu_custom_call.1} parent=5 // pred_fallthru
        _
      %p560 = scmp.le.s32.totalorder 2, %s21
      // Predicated region
      $region53: #{tpu_custom_call.1} parent=5 // pred_check
        %p561 = pneg %p560
      $region54: #{tpu_custom_call.1} parent=5 // pred_check_branch
        %563 = sbr.rel (%p561) target = $region56
      $region55: #{tpu_custom_call.1} parent=5 // pred_region
        %s564 = ssub.s32 %s21, 2
        // Predicated region
        $region57: #{tpu_custom_call.1} parent=55 // pred_check
          %p565 = pneg %p123
        $region58: #{tpu_custom_call.1} parent=55 // pred_check_branch
          %567 = sbr.rel (%p565) target = $region60
        $region59: #{tpu_custom_call.1} parent=55 // pred_region
          %s568 = sand.u32 %s108, 1
          %s569 = scalar_lea.sflag [#allocation4], %s568
          %s570 = sand.u32 %s108, 1
          %s571 = smul.addr %s570, 8
          %s572 = scalar_lea.vmem [#allocation8], %s571
          %573 = dma.done %s569, 128
        $region60: #{tpu_custom_call.1} parent=55 // pred_fallthru
          _
        // Predicated region
        $region61: #{tpu_custom_call.1} parent=55 // pred_check
          %p574 = pneg %p149
        $region62: #{tpu_custom_call.1} parent=55 // pred_check_branch
          %576 = sbr.rel (%p574) target = $region64
        $region63: #{tpu_custom_call.1} parent=55 // pred_region
          %s577 = sand.u32 %s134, 1
          %s578 = scalar_lea.sflag [#allocation10], %s577
          %s579 = sand.u32 %s134, 1
          %s580 = smul.addr %s579, 8
          %s581 = scalar_lea.vmem [#allocation9], %s580
          %582 = dma.done %s578, 128
        $region64: #{tpu_custom_call.1} parent=55 // pred_fallthru
          _
      $region56: #{tpu_custom_call.1} parent=5 // pred_fallthru
        _
    $region6: #{tpu_custom_call.1} parent=1 // loop_footer
      %s25 = sadd.s32 1, %s21
    $region7: #{tpu_custom_call.1} parent=1 // loop_footer_branch
      %20 = sbr.rel target = $region3
    $region8: #{tpu_custom_call.1} parent=1 // loop_exit
      _
    %583 = vsyncpa [#allocation3], 1
    %s584 = scalar_lea.sflag [#allocation3], 1
    %585 = vsyncpa %s584, 1
    %586 = vsyncpa [#allocation6], 1
    %s587 = scalar_lea.sflag [#allocation6], 1
    %588 = vsyncpa %s587, 1
    %589 = vsyncpa [#allocation4], 1
    %s590 = scalar_lea.sflag [#allocation4], 1
    %591 = vsyncpa %s590, 1
    %592 = vsyncpa [#allocation10], 1
    %s593 = scalar_lea.sflag [#allocation10], 1
    %594 = vsyncpa %s593, 1

</llo_original>
